<compile_context>
chip_gen: v7x
topology: tpu7x:2x2x1
jax: 0.10.0
libtpu: 0.0.40
codegen_flags: <defaults>
</compile_context>

<pallas_src>
import functools

import numpy as np
import jax
import jax.numpy as jnp
from jax.experimental import pallas as pl
from jax.experimental.pallas import tpu as pltpu


def _pool_params(in_size: int, out_size: int):
    """Replicates the PyTorch module's stride/kernel computation (static)."""
    stride = int(np.floor(in_size / out_size))
    kernel = int(in_size - (out_size - 1) * stride)
    return kernel, stride


def _pool_matrix(in_size: int, out_size: int) -> np.ndarray:
    """0/1 matrix P of shape (out_size, in_size): P[o, i] = 1 iff input index i
    falls inside the pooling window of output index o."""
    kernel, stride = _pool_params(in_size, out_size)
    starts = np.arange(out_size)[:, None] * stride
    cols = np.arange(in_size)[None, :]
    return ((cols >= starts) & (cols < starts + kernel)).astype(np.float32)


def _pool_gemm_kernel(x_ref, k_ref, o_ref, acc_ref, *, scale):
    # x_ref: (Rt, Kt)   k_ref: (Kt, OHW)   o_ref: (Rt, OHW)   acc_ref: (Rt, OHW) f32
    @pl.when(pl.program_id(1) == 0)
    def _init():
        acc_ref[...] = jnp.zeros_like(acc_ref)

    acc_ref[...] += jnp.dot(x_ref[...], k_ref[...],
                            preferred_element_type=jnp.float32)

    @pl.when(pl.program_id(1) == pl.num_programs(1) - 1)
    def _finalize():
        o_ref[...] = (acc_ref[...] * scale).astype(o_ref.dtype)


def _choose_tiles(R, HW, OHW, itemsize, target_tile_bytes, k_tile_bytes):
    """Pick (row tile, reduction tile). Kt always divides HW exactly."""
    # Reduction (H*W) tile: keep the whole axis if the K slab fits the budget,
    # otherwise split into the largest 128-aligned divisor of HW that fits.
    if HW * OHW * itemsize <= k_tile_bytes or HW % 128 != 0:
        Kt = HW   # TODO(synk): huge non-128-divisible H*W falls back to one block.
    else:
        Kt = 128
        for cand in range(HW - 128, 0, -128):
            if HW % cand == 0 and cand * OHW * itemsize <= k_tile_bytes:
                Kt = cand
                break

    # Row tile: ~target_tile_bytes of input per block, multiple of 8 (sublanes).
    rows_fit = max(1, target_tile_bytes // max(1, Kt * itemsize))
    if rows_fit >= R or R <= 8:
        Rt = R
    else:
        Rt = max(8, (rows_fit // 8) * 8)
    return Rt, Kt


def adaptive_avg_pool2d_custom(x: jax.Array, output_size, *,
                               target_tile_bytes: int = 2 * 1024 * 1024,
                               k_tile_bytes: int = 4 * 1024 * 1024) -> jax.Array:
    """Pallas TPU implementation of AdaptiveAvgPool2dCustom.forward (NCHW)."""
    if isinstance(output_size, int):
        output_size = (output_size, output_size)
    N, C, H, W = x.shape
    OH, OW = int(output_size[0]), int(output_size[1])

    kh, _ = _pool_params(H, OH)
    kw, _ = _pool_params(W, OW)
    scale = 1.0 / float(kh * kw)                       # avg_pool2d divisor

    # Static (H*W, OH*OW) pooling matrix: K[h*W+w, oh*OW+ow] = Ph[oh,h]*Pw[ow,w]
    k_np = np.kron(_pool_matrix(H, OH), _pool_matrix(W, OW)).T
    k_mat = jnp.asarray(k_np, dtype=x.dtype)           # 0/1 entries exact in bf16

    R, HW, OHW = N * C, H * W, OH * OW
    x2 = x.reshape(R, HW)                              # free row-major reshape

    itemsize = np.dtype(x.dtype).itemsize
    Rt, Kt = _choose_tiles(R, HW, OHW, itemsize, target_tile_bytes, k_tile_bytes)
    grid = (pl.cdiv(R, Rt), HW // Kt)

    kernel = functools.partial(_pool_gemm_kernel, scale=scale)

    cost = pl.CostEstimate(
        flops=2 * R * HW * OHW,
        transcendentals=0,
        bytes_accessed=(R * HW + HW * OHW + R * OHW) * itemsize)

    out2 = pl.pallas_call(
        kernel,
        out_shape=jax.ShapeDtypeStruct((R, OHW), x.dtype),
        grid_spec=pltpu.PrefetchScalarGridSpec(
            num_scalar_prefetch=0,
            grid=grid,
            in_specs=[
                pl.BlockSpec((Rt, Kt), lambda r, k: (r, k)),     # lane-dense rows
                pl.BlockSpec((Kt, OHW), lambda r, k: (k, 0)),    # pooling matrix slab
            ],
            out_specs=pl.BlockSpec((Rt, OHW), lambda r, k: (r, 0)),
            scratch_shapes=[pltpu.VMEM((Rt, OHW), jnp.float32)],  # f32 accumulator
        ),
        compiler_params=pltpu.CompilerParams(
            dimension_semantics=("parallel", "arbitrary")),
        cost_estimate=cost,
    )(x2, k_mat)

    return out2.reshape(N, C, OH, OW)                  # free metadata reshape


def _reference_numpy(x: np.ndarray, output_size) -> np.ndarray:
    """Direct numpy re-implementation of the PyTorch forward (for checking)."""
    if isinstance(output_size, int):
        output_size = (output_size, output_size)
    N, C, H, W = x.shape
    OH, OW = output_size
    kh, sh = _pool_params(H, OH)
    kw, sw = _pool_params(W, OW)
    out = np.zeros((N, C, OH, OW), dtype=np.float32)
    for i in range(OH):
        for j in range(OW):
            win = x[:, :, i * sh:i * sh + kh, j * sw:j * sw + kw]
            out[:, :, i, j] = win.astype(np.float32).mean(axis=(-2, -1))
    return out


if __name__ == "__main__":
    key = jax.random.PRNGKey(0)

    # Main case (matches the module's intended use): N=2, C=4, 16x16 -> 8x8.
    N, C, H, W = 2, 4, 16, 16
    output_size = 8
    x = jax.random.normal(key, (N, C, H, W), dtype=jnp.float32)

    out = adaptive_avg_pool2d_custom(x, output_size)
    out = jax.block_until_ready(out)

    ref = _reference_numpy(np.asarray(x), output_size)
    np.testing.assert_allclose(np.asarray(out), ref, rtol=1e-5, atol=1e-5)
    assert out.shape == (N, C, output_size, output_size)
    assert out.dtype == x.dtype

    # Case 2: force the multi-step row-tiled grid path (small row tiles).
    key2 = jax.random.PRNGKey(1)
    x2 = jax.random.normal(key2, (2, 24, 16, 16), dtype=jnp.float32)
    out2 = adaptive_avg_pool2d_custom(x2, 4, target_tile_bytes=4 * 1024)
    out2 = jax.block_until_ready(out2)
    ref2 = _reference_numpy(np.asarray(x2), 4)
    np.testing.assert_allclose(np.asarray(out2), ref2, rtol=1e-5, atol=1e-5)

    # Case 3: force both row tiling AND the H*W reduction split (accumulator path).
    out3 = adaptive_avg_pool2d_custom(x2, 4, target_tile_bytes=4 * 1024,
                                      k_tile_bytes=8 * 1024)
    out3 = jax.block_until_ready(out3)
    np.testing.assert_allclose(np.asarray(out3), ref2, rtol=1e-5, atol=1e-5)

    # Case 4: bf16 inputs (MXU bf16 operands, f32 accumulation, f32 epilogue scale).
    xb = x.astype(jnp.bfloat16)
    outb = adaptive_avg_pool2d_custom(xb, output_size)
    outb = jax.block_until_ready(outb)
    refb = _reference_numpy(np.asarray(xb), output_size)
    np.testing.assert_allclose(np.asarray(outb).astype(np.float32), refb,
                               rtol=2e-2, atol=2e-2)
    assert outb.dtype == jnp.bfloat16

    print("KERNEL_OK")
</pallas_src>

<mosaic_0001>
module attributes {stable_mosaic.version = 11 : i64} {
  func.func @_pool_gemm_kernel(%arg0: i32, %arg1: i32, %arg2: memref<8x256xf32, #tpu.memory_space<vmem>>, %arg3: memref<256x64xf32, #tpu.memory_space<vmem>>, %arg4: memref<8x64xf32, #tpu.memory_space<vmem>>, %arg5: memref<8x64xf32, #tpu.memory_space<vmem>>) attributes {dimension_semantics = [#tpu.dimension_semantics<parallel>, #tpu.dimension_semantics<arbitrary>], iteration_bounds = array<i64: 1, 1>, scalar_prefetch = 0 : i64, scratch_operands = 1 : i64, tpu.core_type = #tpu.core_type<tc>, window_params = [{transform_indices = @transform_0, window_bounds = array<i64: 8, 256>}, {transform_indices = @transform_1, window_bounds = array<i64: 256, 64>}, {transform_indices = @transform_2, window_bounds = array<i64: 8, 64>}]} {
    %c0_i32 = arith.constant 0 : i32
    %0 = arith.cmpi eq, %arg1, %c0_i32 : i32
    %1 = arith.extui %0 : i1 to i32
    %c0_i32_0 = arith.constant 0 : i32
    %2 = arith.cmpi ne, %1, %c0_i32_0 : i32
    scf.if %2 {
      %cst_10 = arith.constant 0.000000e+00 : f32
      %12 = vector.broadcast %cst_10 : f32 to vector<8x64xf32>
      %c0_11 = arith.constant 0 : index
      %c0_12 = arith.constant 0 : index
      %13 = vector.load %arg5[%c0_11, %c0_12] : memref<8x64xf32, #tpu.memory_space<vmem>>, vector<8x64xf32>
      tpu.vector_store %arg5[%c0_11, %c0_12], %12 {strides = array<i32>} : memref<8x64xf32, #tpu.memory_space<vmem>>, vector<8x64xf32>,
    } else {
    }
    %c0 = arith.constant 0 : index
    %c0_1 = arith.constant 0 : index
    %3 = vector.load %arg5[%c0, %c0_1] : memref<8x64xf32, #tpu.memory_space<vmem>>, vector<8x64xf32>
    %c0_2 = arith.constant 0 : index
    %c0_3 = arith.constant 0 : index
    %4 = vector.load %arg2[%c0_2, %c0_3] : memref<8x256xf32, #tpu.memory_space<vmem>>, vector<8x256xf32>
    %c0_4 = arith.constant 0 : index
    %c0_5 = arith.constant 0 : index
    %5 = vector.load %arg3[%c0_4, %c0_5] : memref<256x64xf32, #tpu.memory_space<vmem>>, vector<256x64xf32>
    %cst = arith.constant dense<0.000000e+00> : vector<8x64xf32>
    %6 = tpu.matmul %4, %5, %cst {dimension_numbers = #tpu.dot_dimension_numbers<[1], [0], [0], [1], [0, 0, 1, 1], [], []>} : vector<8x256xf32>, vector<256x64xf32>, vector<8x64xf32> -> vector<8x64xf32>
    %7 = arith.addf %3, %6 : vector<8x64xf32>
    %c0_6 = arith.constant 0 : index
    %c0_7 = arith.constant 0 : index
    %8 = vector.load %arg5[%c0_6, %c0_7] : memref<8x64xf32, #tpu.memory_space<vmem>>, vector<8x64xf32>
    tpu.vector_store %arg5[%c0_6, %c0_7], %7 {strides = array<i32>} : memref<8x64xf32, #tpu.memory_space<vmem>>, vector<8x64xf32>,
    %c0_i32_8 = arith.constant 0 : i32
    %9 = arith.cmpi eq, %arg1, %c0_i32_8 : i32
    %10 = arith.extui %9 : i1 to i32
    %c0_i32_9 = arith.constant 0 : i32
    %11 = arith.cmpi ne, %10, %c0_i32_9 : i32
    scf.if %11 {
      %c0_10 = arith.constant 0 : index
      %c0_11 = arith.constant 0 : index
      %12 = vector.load %arg5[%c0_10, %c0_11] : memref<8x64xf32, #tpu.memory_space<vmem>>, vector<8x64xf32>
      %cst_12 = arith.constant 2.500000e-01 : f32
      %13 = vector.broadcast %cst_12 : f32 to vector<8x64xf32>
      %14 = arith.mulf %12, %13 : vector<8x64xf32>
      %c0_13 = arith.constant 0 : index
      %c0_14 = arith.constant 0 : index
      %15 = vector.load %arg4[%c0_13, %c0_14] : memref<8x64xf32, #tpu.memory_space<vmem>>, vector<8x64xf32>
      tpu.vector_store %arg4[%c0_13, %c0_14], %14 {strides = array<i32>} : memref<8x64xf32, #tpu.memory_space<vmem>>, vector<8x64xf32>,
    } else {
    }
    return
  }
  func.func @transform_0(%arg0: i32, %arg1: i32) -> (i32, i32) {
    %c0_i32 = arith.constant 0 : i32
    return %arg0, %arg1 : i32, i32
  }
  func.func @transform_1(%arg0: i32, %arg1: i32) -> (i32, i32) {
    %c0_i32 = arith.constant 0 : i32
    %c0_i32_0 = arith.constant 0 : i32
    return %arg1, %c0_i32 : i32, i32
  }
  func.func @transform_2(%arg0: i32, %arg1: i32) -> (i32, i32) {
    %c0_i32 = arith.constant 0 : i32
    %c0_i32_0 = arith.constant 0 : i32
    return %arg0, %c0_i32 : i32, i32
  }
}

</mosaic_0001>

<llo_original>
// kernel: tpu_custom_call.1
$region0: #{tpu_custom_call.1}
  #allocation0 [shape = 'u32[]', space=smem, size = 0x4, offset = 0x4, fixed_abs, tag = 'smem constant byte address 0x4 - core index']
  #allocation1 [shape = 'u32[144,128]{1,0:T(1,128)}', space=vmem, size = 0x12000, scoped, tag = 'internal scratch']
  #allocation2 [shape = 'f32[8,64]{1,0:T(8,128)}', space=vmem, size = 0x1000, scoped, tag = 'scratch operand']
  %s0 = inlined_call_operand.vmem [shape: f32[8,256], index: 0, kind: input, shape index: {}]
  %s1 = inlined_call_operand.vmem [shape: f32[256,64], index: 1, kind: input, shape index: {}]
  %s2 = inlined_call_operand.hbm [shape: f32[8,64], index: 2, kind: output, shape index: {}]
  %s3 = sld [smem:[#allocation0]]
  $region26: #{tpu_custom_call.1} parent=0
    _
  %s5 = ssub.s32 1, %s3
  %s6 = scalar_select 0, %s5, %s3
  $region1: #{tpu_custom_call.1} parent=0
    #allocation3 [shape = 'u8[4096]{0}', space=vmem, size = 0x1000, scoped, tag = 'output window, operand 0, single buffered']
    #allocation4 [shape = 's32[1]{0}', space=sflag, size = 0x4, scoped, tag = 'scoped memory for tpu_custom_call.1']
    %7 = vsyncpa [#allocation4], 0
    // Predicated region
    $region2: #{tpu_custom_call.1} parent=1 // pred_check
      _
    $region3: #{tpu_custom_call.1} parent=1 // pred_check_branch
      %9 = sbr.rel (0) target = $region5
    $region4: #{tpu_custom_call.1} parent=1 // pred_region
      _
    $region5: #{tpu_custom_call.1} parent=1 // pred_fallthru
      _
    // Predicated region
    $region6: #{tpu_custom_call.1} parent=1 // pred_check
      _
    $region7: #{tpu_custom_call.1} parent=1 // pred_check_branch
      %11 = sbr.rel (0) target = $region9
    $region8: #{tpu_custom_call.1} parent=1 // pred_region
      _
    $region9: #{tpu_custom_call.1} parent=1 // pred_fallthru
      _
    %p12 = scmp.eq.s32.totalorder 0, 0
    // Predicated region
    $region10: #{tpu_custom_call.1} parent=1 // pred_check
      %p13 = pneg %p12
    $region11: #{tpu_custom_call.1} parent=1 // pred_check_branch
      %15 = sbr.rel (%p13) target = $region13
    $region12: #{tpu_custom_call.1} parent=1 // pred_region
      %vm16 = vcmask 523264
      %17 = vst.msk [vmem:[#allocation2] sm:$0xff] %vm16, 0.0
    $region13: #{tpu_custom_call.1} parent=1 // pred_fallthru
      _
    %v18 = vld [vmem:[#allocation2] sm:$0xff]
    %v19 = vld [vmem:[%s0] sm:$0xff]
    %v20 = vld [vmem:[%s0 + $0x8] sm:$0xff]
    %v21 = vld [vmem:[%s1] sm:$0xff]
    %v22 = vld [vmem:[%s1 + $0x8] sm:$0xff]
    %v23 = vld [vmem:[%s1 + $0x10] sm:$0xff]
    %v24 = vld [vmem:[%s1 + $0x18] sm:$0xff]
    %v25 = vld [vmem:[%s1 + $0x20] sm:$0xff]
    %v26 = vld [vmem:[%s1 + $0x28] sm:$0xff]
    %v27 = vld [vmem:[%s1 + $0x30] sm:$0xff]
    %v28 = vld [vmem:[%s1 + $0x38] sm:$0xff]
    %v29 = vld [vmem:[%s1 + $0x40] sm:$0xff]
    %v30 = vld [vmem:[%s1 + $0x48] sm:$0xff]
    %v31 = vld [vmem:[%s1 + $0x50] sm:$0xff]
    %v32 = vld [vmem:[%s1 + $0x58] sm:$0xff]
    %v33 = vld [vmem:[%s1 + $0x60] sm:$0xff]
    %v34 = vld [vmem:[%s1 + $0x68] sm:$0xff]
    %v35 = vld [vmem:[%s1 + $0x70] sm:$0xff]
    %v36 = vld [vmem:[%s1 + $0x78] sm:$0xff]
    %v37 = vld [vmem:[%s1 + $0x80] sm:$0xff]
    %v38 = vld [vmem:[%s1 + $0x88] sm:$0xff]
    %v39 = vld [vmem:[%s1 + $0x90] sm:$0xff]
    %v40 = vld [vmem:[%s1 + $0x98] sm:$0xff]
    %v41 = vld [vmem:[%s1 + $0xa0] sm:$0xff]
    %v42 = vld [vmem:[%s1 + $0xa8] sm:$0xff]
    %v43 = vld [vmem:[%s1 + $0xb0] sm:$0xff]
    %v44 = vld [vmem:[%s1 + $0xb8] sm:$0xff]
    %v45 = vld [vmem:[%s1 + $0xc0] sm:$0xff]
    %v46 = vld [vmem:[%s1 + $0xc8] sm:$0xff]
    %v47 = vld [vmem:[%s1 + $0xd0] sm:$0xff]
    %v48 = vld [vmem:[%s1 + $0xd8] sm:$0xff]
    %v49 = vld [vmem:[%s1 + $0xe0] sm:$0xff]
    %v50 = vld [vmem:[%s1 + $0xe8] sm:$0xff]
    %v51 = vld [vmem:[%s1 + $0xf0] sm:$0xff]
    %v52 = vld [vmem:[%s1 + $0xf8] sm:$0xff]
    %53 = vmatprep.subr.mxu0 0.0
    %54 = vmatpush1.msra.mxu0 %v21
    %55 = vmatprep.subr.mxu0 0.0
    %56 = vmatpush1.msra.mxu0 %v22
    %57 = vmatprep.subr.mxu0 0.0
    %58 = vmatpush1.msra.mxu0 %v23
    %59 = vmatprep.subr.mxu0 0.0
    %60 = vmatpush1.msra.mxu0 %v24
    %61 = vmatprep.subr.mxu0 0.0
    %62 = vmatpush1.msra.mxu0 %v25
    %63 = vmatprep.subr.mxu0 0.0
    %64 = vmatpush1.msra.mxu0 %v26
    %65 = vmatprep.subr.mxu0 0.0
    %66 = vmatpush1.msra.mxu0 %v27
    %67 = vmatprep.subr.mxu0 0.0
    %68 = vmatpush1.msra.mxu0 %v28
    %69 = vmatprep.subr.mxu0 0.0
    %70 = vmatpush1.msra.mxu0 %v29
    %71 = vmatprep.subr.mxu0 0.0
    %72 = vmatpush1.msra.mxu0 %v30
    %73 = vmatprep.subr.mxu0 0.0
    %74 = vmatpush1.msra.mxu0 %v31
    %75 = vmatprep.subr.mxu0 0.0
    %76 = vmatpush1.msra.mxu0 %v32
    %77 = vmatprep.subr.mxu0 0.0
    %78 = vmatpush1.msra.mxu0 %v33
    %79 = vmatprep.subr.mxu0 0.0
    %80 = vmatpush1.msra.mxu0 %v34
    %81 = vmatprep.subr.mxu0 0.0
    %82 = vmatpush1.msra.mxu0 %v35
    %83 = vmatprep.subr.mxu0 0.0
    %84 = vmatpush1.msra.mxu0 %v36
    %85 = vmatprep.subr.mxu0 0.0
    %86 = vmatpush1.msra.mxu0 %v37
    %87 = vmatprep.subr.mxu0 0.0
    %88 = vmatpush1.msra.mxu0 %v38
    %89 = vmatprep.subr.mxu0 0.0
    %90 = vmatpush1.msra.mxu0 %v39
    %91 = vmatprep.subr.mxu0 0.0
    %92 = vmatpush1.msra.mxu0 %v40
    %93 = vmatprep.subr.mxu0 0.0
    %94 = vmatpush1.msra.mxu0 %v41
    %95 = vmatprep.subr.mxu0 0.0
    %96 = vmatpush1.msra.mxu0 %v42
    %97 = vmatprep.subr.mxu0 0.0
    %98 = vmatpush1.msra.mxu0 %v43
    %99 = vmatprep.subr.mxu0 0.0
    %100 = vmatpush1.msra.mxu0 %v44
    %101 = vmatprep.subr.mxu0 0.0
    %102 = vmatpush1.msra.mxu0 %v45
    %103 = vmatprep.subr.mxu0 0.0
    %104 = vmatpush1.msra.mxu0 %v46
    %105 = vmatprep.subr.mxu0 0.0
    %106 = vmatpush1.msra.mxu0 %v47
    %107 = vmatprep.subr.mxu0 0.0
    %108 = vmatpush1.msra.mxu0 %v48
    %109 = vmatprep.subr.mxu0 0.0
    %110 = vmatpush1.msra.mxu0 %v49
    %111 = vmatprep.subr.mxu0 0.0
    %112 = vmatpush1.msra.mxu0 %v50
    %113 = vmatprep.subr.mxu0 0.0
    %114 = vmatpush1.msra.mxu0 %v51
    %115 = vmatprep.subr.mxu0 0.0
    %116 = vmatpush1.msra.mxu0 %v52
    %117 = vmatprep.mubr.f32.mxu0 %v20
    %118 = vmatmul.mubr.f32.gmra.mrb[0].mxu0 %v19
    %v119 = vpop.f32.mrb[0].mxu0
    %v120 = vadd.f32 0.0, %v119
    %v121 = vpop.f32.mrb[0].mxu0
    %122 = vdwg.mxu0
    %v123 = vadd.f32 %v18, %v120
    %vm124 = vcmask 523264
    %125 = vst.msk [vmem:[#allocation2] sm:$0xff] %vm124, %v123
    // Predicated region
    $region14: #{tpu_custom_call.1} parent=1 // pred_check
      %p126 = pneg %p12
    $region15: #{tpu_custom_call.1} parent=1 // pred_check_branch
      %128 = sbr.rel (%p126) target = $region17
    $region16: #{tpu_custom_call.1} parent=1 // pred_region
      %v129 = vld [vmem:[#allocation2] sm:$0xff]
      %v130 = vmul.f32 %v129, 0.25
      %131 = vst.msk [vmem:[#allocation3] sm:$0xff] %vm124, %v130
    $region17: #{tpu_custom_call.1} parent=1 // pred_fallthru
      _
    // Predicated region
    $region18: #{tpu_custom_call.1} parent=1 // pred_check
      _
    $region19: #{tpu_custom_call.1} parent=1 // pred_check_branch
      %133 = sbr.rel (0) target = $region21
    $region20: #{tpu_custom_call.1} parent=1 // pred_region
      %s135 = ssub.s32 128, 128
      %136 = vsyncadd [#allocation4], %s135
      %s138 = sshll.u32 [#allocation3], 4
      %s139 = int_to_ptr.vmem [resolvable:$true] %s138
      %141 = dma.vmem_to_hbm [thread:$0]  %s139, 128, %s2, [#allocation4]
    $region21: #{tpu_custom_call.1} parent=1 // pred_fallthru
      _
    // Predicated region
    $region22: #{tpu_custom_call.1} parent=1 // pred_check
      _
    $region23: #{tpu_custom_call.1} parent=1 // pred_check_branch
      %143 = sbr.rel (0) target = $region25
    $region24: #{tpu_custom_call.1} parent=1 // pred_region
      %144 = dma.done [#allocation4], 128
    $region25: #{tpu_custom_call.1} parent=1 // pred_fallthru
      _
    %145 = vsyncpa [#allocation4], 1

</llo_original>
